<compile_context>
chip_gen: v5e
topology: v5e:2x2
jax: 0.10.0
libtpu: 0.0.40
codegen_flags: <defaults>
</compile_context>

<pallas_src>
import functools

import jax
import jax.numpy as jnp
from jax.experimental import pallas as pl
from jax.experimental.pallas import tpu as pltpu


# ----------------------------------------------------------------------------
# Pallas kernel: 3x3 same-padded conv on a block of B whole images.
# ----------------------------------------------------------------------------
def _conv3x3_block_kernel(x_ref, w_ref, b_ref, o_ref, *, H, W, mxu_dtype):
    # x_ref: (B, Cin, H*W)     B whole images, NCHW with flattened spatial dims
    # w_ref: (3, Cout, 3*Cin)  conv weight grouped by dy; K ordered (dx, cin)
    # b_ref: (Cout, 1)         f32 bias (lane broadcast)
    # o_ref: (B, Cout, H*W)    output block
    B = x_ref.shape[0]
    HW = H * W

    # Per-pixel validity masks, shape (1, HW): computed once, shared across the
    # B images and broadcast over channels inside jnp.where (free sublane bcast).
    # Row bounds are divide-free flat-index compares; only the column mask
    # needs a single modulo.
    p = jax.lax.broadcasted_iota(jnp.int32, (1, HW), 1)
    col = p % W
    row_ok = (p >= W, None, p < (H - 1) * W)      # oy = -1, 0, +1
    col_ok = (col >= 1, None, col < (W - 1))      # ox = -1, 0, +1

    bias = b_ref[...]                             # (Cout, 1) f32

    for b in range(B):                            # static unroll over images
        x = x_ref[b]                              # (Cin, HW), input dtype
        acc = None
        for dy in range(3):
            oy = dy - 1
            taps = []
            for dx in range(3):
                ox = dx - 1
                valid = row_ok[dy]
                if col_ok[dx] is not None:
                    valid = col_ok[dx] if valid is None else (valid & col_ok[dx])
                s = oy * W + ox                   # flat-index shift of this tap
                tap = x if s == 0 else pltpu.roll(x, shift=(-s) % HW, axis=1)
                if valid is not None:
                    tap = jnp.where(valid, tap, 0)            # zero the halo
                taps.append(tap.astype(mxu_dtype))            # pack for the MXU
            group = jnp.concatenate(taps, axis=0)             # (3*Cin, HW), mxu_dtype
            d = jnp.dot(w_ref[dy], group,
                        preferred_element_type=jnp.float32)   # (Cout, HW) f32 acc
            acc = d if acc is None else acc + d
        o_ref[b] = (acc + bias).astype(o_ref.dtype)


# ----------------------------------------------------------------------------
# Nearest-neighbour resize (matches F.interpolate default mode='nearest').
# ----------------------------------------------------------------------------
def _nearest_resize_nchw(x, out_h, out_w):
    n, c, h, w = x.shape
    rows = (jnp.arange(out_h) * h) // out_h
    cols = (jnp.arange(out_w) * w) // out_w
    return x[:, :, rows[:, None], cols[None, :]]


# ----------------------------------------------------------------------------
# Block-size heuristic: how many whole images per grid step.
# ----------------------------------------------------------------------------
def _pick_images_per_block(n, hw, cin, cout, x_bytes, out_bytes):
    # Conservative VMEM bytes per pixel of a block: per-dy im2col group (kept
    # at 4B to be safe for the mxu_dtype=f32 path), f32 roll/where temporaries,
    # f32 accumulator, and double-buffered input/output blocks.
    per_px = (3 * cin * 4) + (3 * cin * 4) + (cout * 4) \
             + (2 * cin * x_bytes) + (2 * cout * out_bytes)
    budget = 12 * 1024 * 1024          # stay under v5e's 16 MiB default scoped VMEM
    max_lanes = max(hw, budget // max(per_px, 1))
    target_lanes = 4096                 # amortize the ~600-cycle per-step overhead

    divisors = [d for d in range(1, n + 1) if n % d == 0]
    feasible = [d for d in divisors if d * hw <= max_lanes] or [1]
    # Prefer >= 2 grid blocks when the batch allows it (v7x has 2 TensorCores).
    preferred = [d for d in feasible if n // d >= 2] or feasible
    reach = [d for d in preferred if d * hw >= target_lanes]
    return min(reach) if reach else max(preferred)


# ----------------------------------------------------------------------------
# CombineQuantBlock.forward
# ----------------------------------------------------------------------------
@functools.partial(jax.jit, static_argnames=("mxu_dtype",))
def combine_quant_block(input1, input2, weight_oihw, bias, *,
                        mxu_dtype=jnp.bfloat16):
    """input1: (N, in_ch1, H, W); input2: (N, in_ch2, H2, W2) or None.
    weight_oihw: (Cout, in_ch1+in_ch2, 3, 3) (PyTorch Conv2d layout); bias: (Cout,).
    Returns (N, Cout, H, W) in input1.dtype.

    NOTE: the default mxu_dtype=bfloat16 trades bit-exactness with PyTorch's
    f32 Conv2d for speed (f32 accumulation is kept); use mxu_dtype=jnp.float32
    for the numerical-parity path."""
    N, _, H, W = input1.shape
    if input2 is not None:
        x = jnp.concatenate((input1, _nearest_resize_nchw(input2, H, W)), axis=1)
    else:
        x = input1

    Cout, Cin_w, KH, KW = weight_oihw.shape
    assert (KH, KW) == (3, 3)
    if x.shape[1] != Cin_w:
        # input2=None only matches the PyTorch module when in_ch2 == 0.
        raise ValueError(f"conv expects {Cin_w} input channels, got {x.shape[1]}")

    Cin, HW = Cin_w, H * W
    x_flat = x.reshape(N, Cin, HW)                # free reshape (NCHW kept)

    # (Cout, Cin, 3, 3) -> (dy, Cout, dx, cin) -> (3, Cout, 3*Cin):
    # K within each dy group ordered (dx, cin), matching the kernel's tap concat.
    w_r = jnp.transpose(weight_oihw, (2, 0, 3, 1)).reshape(3, Cout, 3 * Cin)
    w_r = w_r.astype(mxu_dtype)
    b_col = bias.reshape(Cout, 1).astype(jnp.float32)

    B = _pick_images_per_block(
        N, HW, Cin, Cout,
        jnp.dtype(x.dtype).itemsize, jnp.dtype(input1.dtype).itemsize)

    kernel = functools.partial(_conv3x3_block_kernel, H=H, W=W,
                               mxu_dtype=mxu_dtype)
    out_flat = pl.pallas_call(
        kernel,
        out_shape=jax.ShapeDtypeStruct((N, Cout, HW), input1.dtype),
        grid=(N // B,),
        in_specs=[
            pl.BlockSpec((B, Cin, HW), lambda g: (g, 0, 0)),
            pl.BlockSpec((3, Cout, 3 * Cin), lambda g: (0, 0, 0)),
            pl.BlockSpec((Cout, 1), lambda g: (0, 0)),
        ],
        out_specs=pl.BlockSpec((B, Cout, HW), lambda g: (g, 0, 0)),
        compiler_params=pltpu.CompilerParams(
            dimension_semantics=("parallel",)),
    )(x_flat, w_r, b_col)
    return out_flat.reshape(N, Cout, H, W)


if __name__ == "__main__":
    # Module config: in_ch1=4, in_ch2=4, out_channel=8.
    in_ch1, in_ch2, out_ch = 4, 4, 8
    N, H, W = 2, 16, 16
    H2, W2 = 8, 8

    key = jax.random.PRNGKey(0)
    k1, k2, kw, kb = jax.random.split(key, 4)

    input1 = jax.random.normal(k1, (N, in_ch1, H, W), dtype=jnp.float32)
    input2 = jax.random.normal(k2, (N, in_ch2, H2, W2), dtype=jnp.float32)

    cin = in_ch1 + in_ch2
    fan_in = cin * 9
    bound = 1.0 / (fan_in ** 0.5)
    weight = jax.random.uniform(kw, (out_ch, cin, 3, 3), dtype=jnp.float32,
                                minval=-bound, maxval=bound)
    bias = jax.random.uniform(kb, (out_ch,), dtype=jnp.float32,
                              minval=-bound, maxval=bound)

    out = jax.block_until_ready(combine_quant_block(input1, input2, weight, bias))
    assert out.shape == (N, out_ch, H, W), out.shape
    assert bool(jnp.all(jnp.isfinite(out)))

    # Reference conv (plain XLA) on the same concatenated input.
    x_cat = jnp.concatenate((input1, _nearest_resize_nchw(input2, H, W)), axis=1)
    ref = jax.lax.conv_general_dilated(
        x_cat, weight, window_strides=(1, 1), padding=((1, 1), (1, 1)),
        dimension_numbers=("NCHW", "OIHW", "NCHW"),
        precision=jax.lax.Precision.HIGHEST) + bias.reshape(1, out_ch, 1, 1)

    # bf16-MXU default path (f32 accumulation).
    assert jnp.allclose(out, ref, atol=5e-2, rtol=5e-2), \
        float(jnp.max(jnp.abs(out - ref)))

    # f32 numerical-parity path.
    out_f32 = jax.block_until_ready(
        combine_quant_block(input1, input2, weight, bias, mxu_dtype=jnp.float32))
    assert jnp.allclose(out_f32, ref, atol=2e-2, rtol=2e-2), \
        float(jnp.max(jnp.abs(out_f32 - ref)))

    print("KERNEL_OK")
</pallas_src>

<mosaic_0001>
module attributes {stable_mosaic.version = 11 : i64} {
  func.func @_conv3x3_block_kernel(%arg0: i32, %arg1: memref<1x8x256xf32, #tpu.memory_space<vmem>>, %arg2: memref<3x8x24xbf16, #tpu.memory_space<vmem>>, %arg3: memref<8x1xf32, #tpu.memory_space<vmem>>, %arg4: memref<1x8x256xf32, #tpu.memory_space<vmem>>) attributes {dimension_semantics = [#tpu.dimension_semantics<parallel>], iteration_bounds = array<i64: 2>, scalar_prefetch = 0 : i64, scratch_operands = 0 : i64, tpu.core_type = #tpu.core_type<tc>, window_params = [{transform_indices = @transform_0, window_bounds = array<i64: 1, 8, 256>}, {pipeline_mode = #tpu.pipeline_mode<synchronous>, transform_indices = @transform_1, window_bounds = array<i64: 3, 8, 24>}, {pipeline_mode = #tpu.pipeline_mode<synchronous>, transform_indices = @transform_2, window_bounds = array<i64: 8, 1>}, {transform_indices = @transform_3, window_bounds = array<i64: 1, 8, 256>}]} {
    %0 = tpu.iota {dimensions = array<i32: 1>} : vector<1x256xi32>
    %c16_i32 = arith.constant 16 : i32
    %c0_i32 = arith.constant 0 : i32
    %1 = arith.cmpi eq, %c16_i32, %c0_i32 : i32
    %c1_i32 = arith.constant 1 : i32
    %2 = arith.select %1, %c1_i32, %c16_i32 : i32
    %3 = vector.broadcast %2 : i32 to vector<1x256xi32>
    %4 = arith.remsi %0, %3 : vector<1x256xi32>
    %c0_i32_0 = arith.constant 0 : i32
    %5 = vector.broadcast %c0_i32_0 : i32 to vector<1x256xi32>
    %6 = arith.cmpi ne, %4, %5 : vector<1x256xi32>
    %c0_i32_1 = arith.constant 0 : i32
    %7 = vector.broadcast %c0_i32_1 : i32 to vector<1x256xi32>
    %8 = arith.cmpi slt, %4, %7 : vector<1x256xi32>
    %c0_i32_2 = arith.constant 0 : i32
    %9 = arith.cmpi slt, %2, %c0_i32_2 : i32
    %10 = vector.broadcast %9 : i1 to vector<1x256xi1>
    %11 = vector.broadcast %10 : vector<1x256xi1> to vector<1x256xi1>
    %12 = arith.xori %8, %11 : vector<1x256xi1>
    %13 = arith.andi %12, %6 : vector<1x256xi1>
    %14 = vector.broadcast %2 : i32 to vector<1x256xi32>
    %15 = arith.addi %4, %14 : vector<1x256xi32>
    %16 = arith.select %13, %15, %4 : vector<1x256xi1>, vector<1x256xi32>
    %c16_i32_3 = arith.constant 16 : i32
    %17 = vector.broadcast %c16_i32_3 : i32 to vector<1x256xi32>
    %18 = arith.cmpi sge, %0, %17 : vector<1x256xi32>
    %c240_i32 = arith.constant 240 : i32
    %19 = vector.broadcast %c240_i32 : i32 to vector<1x256xi32>
    %20 = arith.cmpi slt, %0, %19 : vector<1x256xi32>
    %c1_i32_4 = arith.constant 1 : i32
    %21 = vector.broadcast %c1_i32_4 : i32 to vector<1x256xi32>
    %22 = arith.cmpi sge, %16, %21 : vector<1x256xi32>
    %c15_i32 = arith.constant 15 : i32
    %23 = vector.broadcast %c15_i32 : i32 to vector<1x256xi32>
    %24 = arith.cmpi slt, %16, %23 : vector<1x256xi32>
    %c0 = arith.constant 0 : index
    %c0_5 = arith.constant 0 : index
    %25 = vector.load %arg3[%c0, %c0_5] : memref<8x1xf32, #tpu.memory_space<vmem>>, vector<8x1xf32>
    %c0_6 = arith.constant 0 : index
    %c0_7 = arith.constant 0 : index
    %c0_8 = arith.constant 0 : index
    %26 = vector.load %arg1[%c0_6, %c0_7, %c0_8] : memref<1x8x256xf32, #tpu.memory_space<vmem>>, vector<1x8x256xf32>
    %27 = vector.shape_cast %26 : vector<1x8x256xf32> to vector<8x256xf32>
    %28 = arith.andi %18, %22 : vector<1x256xi1>
    %c17_i32 = arith.constant 17 : i32
    %29 = tpu.dynamic_rotate %27 by %c17_i32 dim 1 : vector<8x256xf32>, i32 -> vector<8x256xf32>
    %c0_i32_9 = arith.constant 0 : i32
    %30 = arith.sitofp %c0_i32_9 : i32 to f32
    %31 = vector.shape_cast %28 : vector<1x256xi1> to vector<1x256xi1>
    %32 = vector.broadcast %31 : vector<1x256xi1> to vector<8x256xi1>
    %33 = vector.broadcast %30 : f32 to vector<8x256xf32>
    %34 = arith.select %32, %29, %33 : vector<8x256xi1>, vector<8x256xf32>
    %35 = arith.truncf %34 : vector<8x256xf32> to vector<8x256xbf16>
    %c16_i32_10 = arith.constant 16 : i32
    %36 = tpu.dynamic_rotate %27 by %c16_i32_10 dim 1 : vector<8x256xf32>, i32 -> vector<8x256xf32>
    %c0_i32_11 = arith.constant 0 : i32
    %37 = arith.sitofp %c0_i32_11 : i32 to f32
    %38 = vector.shape_cast %18 : vector<1x256xi1> to vector<1x256xi1>
    %39 = vector.broadcast %38 : vector<1x256xi1> to vector<8x256xi1>
    %40 = vector.broadcast %37 : f32 to vector<8x256xf32>
    %41 = arith.select %39, %36, %40 : vector<8x256xi1>, vector<8x256xf32>
    %42 = arith.truncf %41 : vector<8x256xf32> to vector<8x256xbf16>
    %43 = arith.andi %18, %24 : vector<1x256xi1>
    %c15_i32_12 = arith.constant 15 : i32
    %44 = tpu.dynamic_rotate %27 by %c15_i32_12 dim 1 : vector<8x256xf32>, i32 -> vector<8x256xf32>
    %c0_i32_13 = arith.constant 0 : i32
    %45 = arith.sitofp %c0_i32_13 : i32 to f32
    %46 = vector.shape_cast %43 : vector<1x256xi1> to vector<1x256xi1>
    %47 = vector.broadcast %46 : vector<1x256xi1> to vector<8x256xi1>
    %48 = vector.broadcast %45 : f32 to vector<8x256xf32>
    %49 = arith.select %47, %44, %48 : vector<8x256xi1>, vector<8x256xf32>
    %50 = arith.truncf %49 : vector<8x256xf32> to vector<8x256xbf16>
    %51 = tpu.concatenate %35, %42, %50 in 0 : vector<8x256xbf16>, vector<8x256xbf16>, vector<8x256xbf16> -> vector<24x256xbf16>
    %c0_14 = arith.constant 0 : index
    %c0_15 = arith.constant 0 : index
    %c0_16 = arith.constant 0 : index
    %52 = vector.load %arg2[%c0_14, %c0_15, %c0_16] : memref<3x8x24xbf16, #tpu.memory_space<vmem>>, vector<1x8x24xbf16>
    %53 = vector.shape_cast %52 : vector<1x8x24xbf16> to vector<8x24xbf16>
    %cst = arith.constant dense<0.000000e+00> : vector<8x256xf32>
    %54 = tpu.matmul %53, %51, %cst {dimension_numbers = #tpu.dot_dimension_numbers<[1], [0], [0], [1], [0, 0, 1, 1], [], []>} : vector<8x24xbf16>, vector<24x256xbf16>, vector<8x256xf32> -> vector<8x256xf32>
    %c1_i32_17 = arith.constant 1 : i32
    %55 = tpu.dynamic_rotate %27 by %c1_i32_17 dim 1 : vector<8x256xf32>, i32 -> vector<8x256xf32>
    %c0_i32_18 = arith.constant 0 : i32
    %56 = arith.sitofp %c0_i32_18 : i32 to f32
    %57 = vector.shape_cast %22 : vector<1x256xi1> to vector<1x256xi1>
    %58 = vector.broadcast %57 : vector<1x256xi1> to vector<8x256xi1>
    %59 = vector.broadcast %56 : f32 to vector<8x256xf32>
    %60 = arith.select %58, %55, %59 : vector<8x256xi1>, vector<8x256xf32>
    %61 = arith.truncf %60 : vector<8x256xf32> to vector<8x256xbf16>
    %62 = arith.truncf %27 : vector<8x256xf32> to vector<8x256xbf16>
    %c255_i32 = arith.constant 255 : i32
    %63 = tpu.dynamic_rotate %27 by %c255_i32 dim 1 : vector<8x256xf32>, i32 -> vector<8x256xf32>
    %c0_i32_19 = arith.constant 0 : i32
    %64 = arith.sitofp %c0_i32_19 : i32 to f32
    %65 = vector.shape_cast %24 : vector<1x256xi1> to vector<1x256xi1>
    %66 = vector.broadcast %65 : vector<1x256xi1> to vector<8x256xi1>
    %67 = vector.broadcast %64 : f32 to vector<8x256xf32>
    %68 = arith.select %66, %63, %67 : vector<8x256xi1>, vector<8x256xf32>
    %69 = arith.truncf %68 : vector<8x256xf32> to vector<8x256xbf16>
    %70 = tpu.concatenate %61, %62, %69 in 0 : vector<8x256xbf16>, vector<8x256xbf16>, vector<8x256xbf16> -> vector<24x256xbf16>
    %c1 = arith.constant 1 : index
    %c0_20 = arith.constant 0 : index
    %c0_21 = arith.constant 0 : index
    %71 = vector.load %arg2[%c1, %c0_20, %c0_21] : memref<3x8x24xbf16, #tpu.memory_space<vmem>>, vector<1x8x24xbf16>
    %72 = vector.shape_cast %71 : vector<1x8x24xbf16> to vector<8x24xbf16>
    %cst_22 = arith.constant dense<0.000000e+00> : vector<8x256xf32>
    %73 = tpu.matmul %72, %70, %cst_22 {dimension_numbers = #tpu.dot_dimension_numbers<[1], [0], [0], [1], [0, 0, 1, 1], [], []>} : vector<8x24xbf16>, vector<24x256xbf16>, vector<8x256xf32> -> vector<8x256xf32>
    %74 = arith.addf %54, %73 : vector<8x256xf32>
    %75 = arith.andi %20, %22 : vector<1x256xi1>
    %c241_i32 = arith.constant 241 : i32
    %76 = tpu.dynamic_rotate %27 by %c241_i32 dim 1 : vector<8x256xf32>, i32 -> vector<8x256xf32>
    %c0_i32_23 = arith.constant 0 : i32
    %77 = arith.sitofp %c0_i32_23 : i32 to f32
    %78 = vector.shape_cast %75 : vector<1x256xi1> to vector<1x256xi1>
    %79 = vector.broadcast %78 : vector<1x256xi1> to vector<8x256xi1>
    %80 = vector.broadcast %77 : f32 to vector<8x256xf32>
    %81 = arith.select %79, %76, %80 : vector<8x256xi1>, vector<8x256xf32>
    %82 = arith.truncf %81 : vector<8x256xf32> to vector<8x256xbf16>
    %c240_i32_24 = arith.constant 240 : i32
    %83 = tpu.dynamic_rotate %27 by %c240_i32_24 dim 1 : vector<8x256xf32>, i32 -> vector<8x256xf32>
    %c0_i32_25 = arith.constant 0 : i32
    %84 = arith.sitofp %c0_i32_25 : i32 to f32
    %85 = vector.shape_cast %20 : vector<1x256xi1> to vector<1x256xi1>
    %86 = vector.broadcast %85 : vector<1x256xi1> to vector<8x256xi1>
    %87 = vector.broadcast %84 : f32 to vector<8x256xf32>
    %88 = arith.select %86, %83, %87 : vector<8x256xi1>, vector<8x256xf32>
    %89 = arith.truncf %88 : vector<8x256xf32> to vector<8x256xbf16>
    %90 = arith.andi %20, %24 : vector<1x256xi1>
    %c239_i32 = arith.constant 239 : i32
    %91 = tpu.dynamic_rotate %27 by %c239_i32 dim 1 : vector<8x256xf32>, i32 -> vector<8x256xf32>
    %c0_i32_26 = arith.constant 0 : i32
    %92 = arith.sitofp %c0_i32_26 : i32 to f32
    %93 = vector.shape_cast %90 : vector<1x256xi1> to vector<1x256xi1>
    %94 = vector.broadcast %93 : vector<1x256xi1> to vector<8x256xi1>
    %95 = vector.broadcast %92 : f32 to vector<8x256xf32>
    %96 = arith.select %94, %91, %95 : vector<8x256xi1>, vector<8x256xf32>
    %97 = arith.truncf %96 : vector<8x256xf32> to vector<8x256xbf16>
    %98 = tpu.concatenate %82, %89, %97 in 0 : vector<8x256xbf16>, vector<8x256xbf16>, vector<8x256xbf16> -> vector<24x256xbf16>
    %c2 = arith.constant 2 : index
    %c0_27 = arith.constant 0 : index
    %c0_28 = arith.constant 0 : index
    %99 = vector.load %arg2[%c2, %c0_27, %c0_28] : memref<3x8x24xbf16, #tpu.memory_space<vmem>>, vector<1x8x24xbf16>
    %100 = vector.shape_cast %99 : vector<1x8x24xbf16> to vector<8x24xbf16>
    %cst_29 = arith.constant dense<0.000000e+00> : vector<8x256xf32>
    %101 = tpu.matmul %100, %98, %cst_29 {dimension_numbers = #tpu.dot_dimension_numbers<[1], [0], [0], [1], [0, 0, 1, 1], [], []>} : vector<8x24xbf16>, vector<24x256xbf16>, vector<8x256xf32> -> vector<8x256xf32>
    %102 = arith.addf %74, %101 : vector<8x256xf32>
    %103 = vector.broadcast %25 : vector<8x1xf32> to vector<8x256xf32>
    %104 = arith.addf %102, %103 : vector<8x256xf32>
    %c0_30 = arith.constant 0 : index
    %c0_31 = arith.constant 0 : index
    %c0_32 = arith.constant 0 : index
    %105 = vector.load %arg4[%c0_30, %c0_31, %c0_32] : memref<1x8x256xf32, #tpu.memory_space<vmem>>, vector<1x8x256xf32>
    %106 = vector.shape_cast %105 : vector<1x8x256xf32> to vector<8x256xf32>
    %107 = vector.shape_cast %104 : vector<8x256xf32> to vector<1x8x256xf32>
    tpu.vector_store %arg4[%c0_30, %c0_31, %c0_32], %107 {strides = array<i32>} : memref<1x8x256xf32, #tpu.memory_space<vmem>>, vector<1x8x256xf32>,
    return
  }
  func.func @transform_0(%arg0: i32) -> (i32, i32, i32) {
    %c0_i32 = arith.constant 0 : i32
    %c0_i32_0 = arith.constant 0 : i32
    %c0_i32_1 = arith.constant 0 : i32
    return %arg0, %c0_i32, %c0_i32_0 : i32, i32, i32
  }
  func.func @transform_1(%arg0: i32) -> (i32, i32, i32) {
    %c0_i32 = arith.constant 0 : i32
    %c0_i32_0 = arith.constant 0 : i32
    %c0_i32_1 = arith.constant 0 : i32
    %c0_i32_2 = arith.constant 0 : i32
    return %c0_i32, %c0_i32_0, %c0_i32_1 : i32, i32, i32
  }
  func.func @transform_2(%arg0: i32) -> (i32, i32) {
    %c0_i32 = arith.constant 0 : i32
    %c0_i32_0 = arith.constant 0 : i32
    %c0_i32_1 = arith.constant 0 : i32
    return %c0_i32, %c0_i32_0 : i32, i32
  }
  func.func @transform_3(%arg0: i32) -> (i32, i32, i32) {
    %c0_i32 = arith.constant 0 : i32
    %c0_i32_0 = arith.constant 0 : i32
    %c0_i32_1 = arith.constant 0 : i32
    return %arg0, %c0_i32, %c0_i32_0 : i32, i32, i32
  }
}

</mosaic_0001>

<llo_original>
// kernel: combine_quant_block.1
$region0: #{combine_quant_block.1}
  #allocation0 [shape = 'u32[]', space=smem, size = 0x4, offset = 0x4, fixed_abs, tag = 'smem constant byte address 0x4 - core index']
  #allocation1 [shape = 'u32[72,128]{1,0:T(1,128)}', space=vmem, size = 0x9000, scoped, tag = 'internal scratch']
  %s0 = inlined_call_operand.vmem [shape: f32[2,8,256], index: 0, kind: input, shape index: {}]
  %s1 = inlined_call_operand.vmem [shape: bf16[3,8,24], index: 1, kind: input, shape index: {}]
  %s2 = inlined_call_operand.vmem [shape: f32[8,1], index: 2, kind: input, shape index: {}]
  %s3 = inlined_call_operand.vmem [shape: f32[2,8,256], index: 3, kind: output, shape index: {}]
  %s4 = sld [smem:[#allocation0]]
  $region45: #{combine_quant_block.1} parent=0
    _
  %s6 = ssub.s32 1, %s4
  %s7 = scalar_select 0, %s6, %s4
  loop: start=0, step=1, limit=4
  $region2: #{combine_quant_block.1} parent=0 // loop_pre_header
    _
  $region3: #{combine_quant_block.1} parent=0 // loop_header
    %s9 = sphi 0, %s13
    %p10 = scmp.ge.s32.totalorder %s9, 4
    %s19 = sphi 0, %s21
    %s22 = sphi 0, %s19
    %s23 = sphi 0, %s22
    %s39 = sphi 0, %s23
    %s43 = sphi 0, %s43
    %s45 = sphi 0, %s43
    %s46 = sphi 0, %s45
    %s60 = sphi 0, %s46
    %s64 = sphi 0, %s64
    %s66 = sphi 0, %s64
    %s67 = sphi 0, %s66
    %s81 = sphi 0, %s67
    %s87 = sphi 0, %s89
    %s90 = sphi 0, %s87
    %s91 = sphi 0, %s90
    %s107 = sphi 0, %s91
  $region4: #{combine_quant_block.1} parent=0 // loop_header_branch
    %12 = sbr.rel (%p10) target = $region8
  $region5: #{combine_quant_block.1} parent=0 // loop_body
    %s14 = ssub.s32 %s9, 1
    %s15 = ssub.s32 %s9, 2
    %s16 = sadd.s32 %s9, 1
    %s17 = ssub.s32 %s9, %s16
    %p18 = scmp.eq.s32.totalorder %s17, 0
    %s20 = sadd.s32 %s19, 1
    %s21 = scalar_select %p18, %s19, %s20
    %p24 = pneg %p18
    %p25 = scmp.eq.s32.totalorder %s9, 1
    %p26 = por %p24, %p25
    %p27 = scmp.ne.s32.totalorder %s19, %s22
    %p28 = scmp.eq.s32.totalorder %s9, 0
    %p29 = por %p27, %p28
    %p30 = scmp.ne.s32.totalorder %s19, %s22
    %p31 = scmp.eq.s32.totalorder %s14, 1
    %p32 = por %p30, %p31
    %p33 = scmp.ne.s32.totalorder %s22, %s23
    %p34 = scmp.eq.s32.totalorder %s14, 0
    %p35 = por %p33, %p34
    %p36 = scmp.ne.s32.totalorder %s22, %s23
    %p37 = scmp.eq.s32.totalorder %s15, 1
    %p38 = por %p36, %p37
    %p40 = scmp.ne.s32.totalorder %s23, %s39
    %p41 = scmp.eq.s32.totalorder %s15, 0
    %p42 = por %p40, %p41
    %s44 = sadd.s32 %s43, 1
    %p47 = scmp.eq.s32.totalorder %s9, 1
    %p48 = scmp.ne.s32.totalorder %s43, %s45
    %p49 = scmp.eq.s32.totalorder %s9, 0
    %p50 = por %p48, %p49
    %p51 = scmp.ne.s32.totalorder %s43, %s45
    %p52 = scmp.eq.s32.totalorder %s14, 1
    %p53 = por %p51, %p52
    %p54 = scmp.ne.s32.totalorder %s45, %s46
    %p55 = scmp.eq.s32.totalorder %s14, 0
    %p56 = por %p54, %p55
    %p57 = scmp.ne.s32.totalorder %s45, %s46
    %p58 = scmp.eq.s32.totalorder %s15, 1
    %p59 = por %p57, %p58
    %p61 = scmp.ne.s32.totalorder %s46, %s60
    %p62 = scmp.eq.s32.totalorder %s15, 0
    %p63 = por %p61, %p62
    %s65 = sadd.s32 %s64, 1
    %p68 = scmp.eq.s32.totalorder %s9, 1
    %p69 = scmp.ne.s32.totalorder %s64, %s66
    %p70 = scmp.eq.s32.totalorder %s9, 0
    %p71 = por %p69, %p70
    %p72 = scmp.ne.s32.totalorder %s64, %s66
    %p73 = scmp.eq.s32.totalorder %s14, 1
    %p74 = por %p72, %p73
    %p75 = scmp.ne.s32.totalorder %s66, %s67
    %p76 = scmp.eq.s32.totalorder %s14, 0
    %p77 = por %p75, %p76
    %p78 = scmp.ne.s32.totalorder %s66, %s67
    %p79 = scmp.eq.s32.totalorder %s15, 1
    %p80 = por %p78, %p79
    %p82 = scmp.ne.s32.totalorder %s67, %s81
    %p83 = scmp.eq.s32.totalorder %s15, 0
    %p84 = por %p82, %p83
    %s85 = ssub.s32 %s9, %s16
    %p86 = scmp.eq.s32.totalorder %s85, 0
    %s88 = sadd.s32 %s87, 1
    %s89 = scalar_select %p86, %s87, %s88
    %p92 = pneg %p86
    %p93 = scmp.eq.s32.totalorder %s9, 1
    %p94 = por %p92, %p93
    %p95 = scmp.ne.s32.totalorder %s87, %s90
    %p96 = scmp.eq.s32.totalorder %s9, 0
    %p97 = por %p95, %p96
    %p98 = scmp.ne.s32.totalorder %s87, %s90
    %p99 = scmp.eq.s32.totalorder %s14, 1
    %p100 = por %p98, %p99
    %p101 = scmp.ne.s32.totalorder %s90, %s91
    %p102 = scmp.eq.s32.totalorder %s14, 0
    %p103 = por %p101, %p102
    %p104 = scmp.ne.s32.totalorder %s90, %s91
    %p105 = scmp.eq.s32.totalorder %s15, 1
    %p106 = por %p104, %p105
    %p108 = scmp.ne.s32.totalorder %s91, %s107
    %p109 = scmp.eq.s32.totalorder %s15, 0
    %p110 = por %p108, %p109
    %p111 = scmp.le.s32.totalorder 1, %s9
    %p112 = scmp.lt.s32.totalorder %s9, 3
    %p113 = pnand %p111, %p112
    %p114 = pneg %p113
    // Predicated region
    $region9: #{combine_quant_block.1} parent=5 // pred_check
      _
    $region10: #{combine_quant_block.1} parent=5 // pred_check_branch
      %116 = sbr.rel (%p113) target = $region12
    $region11: #{combine_quant_block.1} parent=5 // pred_region
      %s117 = ssub.s32 %s9, 1
      // Predicated region
      $region13: #{combine_quant_block.1} parent=11 // pred_check
        %p118 = pneg %p56
      $region14: #{combine_quant_block.1} parent=11 // pred_check_branch
        %120 = sbr.rel (%p118) target = $region16
      $region15: #{combine_quant_block.1} parent=11 // pred_region
        _
      $region16: #{combine_quant_block.1} parent=11 // pred_fallthru
        _
      // Predicated region
      $region17: #{combine_quant_block.1} parent=11 // pred_check
        %p121 = pneg %p77
      $region18: #{combine_quant_block.1} parent=11 // pred_check_branch
        %123 = sbr.rel (%p121) target = $region20
      $region19: #{combine_quant_block.1} parent=11 // pred_region
        _
      $region20: #{combine_quant_block.1} parent=11 // pred_fallthru
        _
    $region12: #{combine_quant_block.1} parent=5 // pred_fallthru
      _
    %p124 = scmp.lt.s32.totalorder %s9, 2
    // Predicated region
    $region21: #{combine_quant_block.1} parent=5 // pred_check
      %p125 = pneg %p124
    $region22: #{combine_quant_block.1} parent=5 // pred_check_branch
      %127 = sbr.rel (%p125) target = $region24
    $region23: #{combine_quant_block.1} parent=5 // pred_region
      // Predicated region
      $region25: #{combine_quant_block.1} parent=23 // pred_check
        %p128 = pneg %p29
      $region26: #{combine_quant_block.1} parent=23 // pred_check_branch
        %130 = sbr.rel (%p128) target = $region28
      $region27: #{combine_quant_block.1} parent=23 // pred_region
        %p131 = scmp.lt.s32.totalorder %s9, 1
        %s132 = scalar_select %p131, %s9, 1
        %s133 = smul.addr %s132, 2
        %s134 = smul.addr %s133, 8
        %s135 = scalar_lea.vmem %s0, %s134
      $region28: #{combine_quant_block.1} parent=23 // pred_fallthru
        _
    $region24: #{combine_quant_block.1} parent=5 // pred_fallthru
      _
    %p136 = scmp.le.s32.totalorder 1, %s9
    %p137 = scmp.lt.s32.totalorder %s9, 3
    %p138 = pnand %p136, %p137
    %p139 = pneg %p138
    // Predicated region
    $region29: #{combine_quant_block.1} parent=5 // pred_check
      _
    $region30: #{combine_quant_block.1} parent=5 // pred_check_branch
      %141 = sbr.rel (%p138) target = $region32
    $region31: #{combine_quant_block.1} parent=5 // pred_region
      %s142 = ssub.s32 %s9, 1
      %p143 = scmp.lt.s32.totalorder %s14, 1
      %s144 = scalar_select %p143, %s14, 1
      %s145 = smul.addr %s144, 2
      %s146 = smul.addr %s145, 8
      %s147 = scalar_lea.vmem %s0, %s146
      %p148 = pneg %p35
      %p149 = pneg %p32
      %p150 = pneg %p56
      %p151 = pneg %p53
      %p152 = pneg %p77
      %p153 = pneg %p74
      %p154 = pneg %p103
      %p155 = pneg %p100
      %p156 = scmp.lt.s32.totalorder %s14, 1
      %s157 = scalar_select %p156, %s14, 1
      %s158 = smul.addr %s157, 2
      %s159 = smul.addr %s158, 8
      %s160 = scalar_lea.vmem %s3, %s159
      %p161 = scmp.lt.s32.totalorder %s14, 1
      %s162 = scalar_select %p161, %s14, 1
      %s163 = smul.addr %s162, 2
      %s164 = smul.addr %s163, 8
      %s165 = scalar_lea.vmem %s0, %s164
      %p166 = scmp.lt.s32.totalorder %s14, 1
      %s167 = scalar_select %p166, %s14, 1
      %s168 = smul.addr %s167, 2
      %s169 = smul.addr %s168, 8
      %s170 = scalar_lea.vmem %s3, %s169
      %v172 = vlaneseq
      %v173 = vand.u32 %v172, 127
      %v174 = vadd.s32 %v173, 128
      %vm175 = vcmp.lt.s32.totalorder %v173, 0
      %v176 = vsub.s32 0, %v173
      %v177 = vsel %vm175, %v176, %v173
      %v178 = vshrl.u32 %v177, 4
      %v179 = vand.u32 %v177, 15
      %v180 = vsub.s32 0, %v179
      %v181 = vsel %vm175, %v180, %v179
      %vm182 = vcmp.lt.s32.totalorder %v174, 0
      %v183 = vsub.s32 0, %v174
      %v184 = vsel %vm182, %v183, %v174
      %v185 = vshrl.u32 %v184, 4
      %v186 = vand.u32 %v184, 15
      %v187 = vsub.s32 0, %v186
      %v188 = vsel %vm182, %v187, %v186
      %vm189 = vcmp.ne.s32.totalorder %v181, 0
      %vm190 = vcmp.ne.s32.totalorder %v188, 0
      %vm191 = vcmp.lt.s32.totalorder %v181, 0
      %vm192 = vcmp.lt.s32.totalorder %v188, 0
      %vm193 = vmand %vm191, %vm189
      %vm194 = vmand %vm192, %vm190
      %v195 = vadd.s32 %v181, 16
      %v196 = vadd.s32 %v188, 16
      %v197 = vsel %vm193, %v195, %v181
      %v198 = vsel %vm194, %v196, %v188
      %vm199 = vcmp.ge.s32.totalorder %v173, 16
      %vm200 = vcmp.ge.s32.totalorder %v174, 16
      %vm201 = vcmp.lt.s32.totalorder %v173, 240
      %vm202 = vcmp.lt.s32.totalorder %v174, 240
      %vm203 = vcmp.ge.s32.totalorder %v197, 1
      %vm204 = vcmp.ge.s32.totalorder %v198, 1
      %vm205 = vcmp.lt.s32.totalorder %v197, 15
      %vm206 = vcmp.lt.s32.totalorder %v198, 15
      %v207 = vld [vmem:[%s2] sm:$0xff]
      %v208 = vld [vmem:[%s165] sm:$0xff]
      %v209 = vld [vmem:[%s165 + $0x8] sm:$0xff]
      %vm210 = vmand %vm199, %vm203
      %vm211 = vmand %vm200, %vm204
      %212 = vrot.lane.b32.xlu0 %v208, 17
      %v213 = vpop.permute.xlu0 %212
      %214 = vrot.lane.b32.xlu0 %v209, 17
      %v215 = vpop.permute.xlu0 %214
      %vm216 = vcmp.lt.s32.totalorder %v173, 17
      %v217 = vsel %vm216, %v213, %v215
      %v218 = vsel %vm216, %v215, %v213
      %v219 = vsel %vm210, 1, 0
      %v220 = vsel %vm211, 1, 0
      %vm221 = vcmp.eq.s32.totalorder %v219, 1
      %vm222 = vcmp.eq.s32.totalorder %v220, 1
      %v223 = vsel %vm221, %v218, 0.0
      %v224 = vsel %vm222, %v217, 0.0
      %v225 = vpack.c.bf16 %v224, %v223
      %226 = vrot.lane.b32.xlu0 %v208, 16
      %v227 = vpop.permute.xlu0 %226
      %228 = vrot.lane.b32.xlu0 %v209, 16
      %v229 = vpop.permute.xlu0 %228
      %vm230 = vcmp.lt.s32.totalorder %v173, 16
      %v231 = vsel %vm230, %v227, %v229
      %v232 = vsel %vm230, %v229, %v227
      %v233 = vsel %vm199, 1, 0
      %v234 = vsel %vm200, 1, 0
      %vm235 = vcmp.eq.s32.totalorder %v233, 1
      %vm236 = vcmp.eq.s32.totalorder %v234, 1
      %v237 = vsel %vm235, %v232, 0.0
      %v238 = vsel %vm236, %v231, 0.0
      %v239 = vpack.c.bf16 %v238, %v237
      %vm240 = vmand %vm199, %vm205
      %vm241 = vmand %vm200, %vm206
      %242 = vrot.lane.b32.xlu0 %v208, 15
      %v243 = vpop.permute.xlu0 %242
      %244 = vrot.lane.b32.xlu0 %v209, 15
      %v245 = vpop.permute.xlu0 %244
      %vm246 = vcmp.lt.s32.totalorder %v173, 15
      %v247 = vsel %vm246, %v243, %v245
      %v248 = vsel %vm246, %v245, %v243
      %v249 = vsel %vm240, 1, 0
      %v250 = vsel %vm241, 1, 0
      %vm251 = vcmp.eq.s32.totalorder %v249, 1
      %vm252 = vcmp.eq.s32.totalorder %v250, 1
      %v253 = vsel %vm251, %v248, 0.0
      %v254 = vsel %vm252, %v247, 0.0
      %v255 = vpack.c.bf16 %v254, %v253
      %v257 = vunpack.c.l.b16 %v225
      %v258 = vunpack.c.h.b16 %v225
      %v259 = vpack.c.b16 %v257, %v257
      %v260 = vpack.c.b16 %v258, %v258
      %v262 = vunpack.c.l.b16 %v239
      %v263 = vunpack.c.h.b16 %v239
      %v264 = vpack.c.b16 %v262, %v262
      %v265 = vpack.c.b16 %v263, %v263
      %v267 = vunpack.c.l.b16 %v255
      %v268 = vunpack.c.h.b16 %v255
      %v269 = vpack.c.b16 %v267, %v267
      %v270 = vpack.c.b16 %v268, %v268
      %vm271 = vcmask 1043456
      %v274 = vsel %vm271, %v259, %v264
      %v278 = vsel %vm271, %v260, %v265
      %v280 = vld [vmem:[%s1] sm:$0xf]
      %281 = vrot.lane.b32.xlu0 %v208, 1
      %v282 = vpop.permute.xlu0 %281
      %283 = vrot.lane.b32.xlu0 %v209, 1
      %v284 = vpop.permute.xlu0 %283
      %vm285 = vcmp.lt.s32.totalorder %v173, 1
      %v286 = vsel %vm285, %v282, %v284
      %v287 = vsel %vm285, %v284, %v282
      %v288 = vsel %vm203, 1, 0
      %v289 = vsel %vm204, 1, 0
      %vm290 = vcmp.eq.s32.totalorder %v288, 1
      %vm291 = vcmp.eq.s32.totalorder %v289, 1
      %v292 = vsel %vm290, %v287, 0.0
      %v293 = vsel %vm291, %v286, 0.0
      %v294 = vpack.c.bf16 %v293, %v292
      %v295 = vpack.c.bf16 %v209, %v208
      %296 = vrot.lane.b32.xlu0 %v208, 127
      %v297 = vpop.permute.xlu0 %296
      %298 = vrot.lane.b32.xlu0 %v209, 127
      %v299 = vpop.permute.xlu0 %298
      %vm300 = vcmp.lt.s32.totalorder %v173, 127
      %v301 = vsel %vm300, %v297, %v299
      %v302 = vsel %vm300, %v299, %v297
      %v303 = vsel %vm205, 1, 0
      %v304 = vsel %vm206, 1, 0
      %vm305 = vcmp.eq.s32.totalorder %v303, 1
      %vm306 = vcmp.eq.s32.totalorder %v304, 1
      %v307 = vsel %vm305, %v301, 0.0
      %v308 = vsel %vm306, %v302, 0.0
      %v309 = vpack.c.bf16 %v308, %v307
      %v311 = vunpack.c.l.b16 %v294
      %v312 = vunpack.c.h.b16 %v294
      %v313 = vpack.c.b16 %v311, %v311
      %v314 = vpack.c.b16 %v312, %v312
      %v316 = vunpack.c.l.b16 %v295
      %v317 = vunpack.c.h.b16 %v295
      %v318 = vpack.c.b16 %v316, %v316
      %v319 = vpack.c.b16 %v317, %v317
      %v321 = vunpack.c.l.b16 %v309
      %v322 = vunpack.c.h.b16 %v309
      %v323 = vpack.c.b16 %v321, %v321
      %v324 = vpack.c.b16 %v322, %v322
      %v327 = vsel %vm271, %v313, %v318
      %v331 = vsel %vm271, %v314, %v319
      %s333 = scalar_lea.vmem %s1, 4
      %v334 = vld [vmem:[%s333] sm:$0xf]
      %vm335 = vcmask 195584
      %v337 = vsel %vm335, %v334, 0
      %v340 = vsel %vm271, %v323, 0
      %v343 = vsel %vm271, %v324, 0
      %345 = vmatpush.bf16.msra.mxu0 0
      %346 = vmatpush.bf16.msra.mxu0 0
      %347 = vmatpush.bf16.msra.mxu0 0
      %348 = vmatpush.bf16.msra.mxu0 0
      %349 = vmatpush.bf16.msra.mxu0 0
      %350 = vmatpush.bf16.msra.mxu0 0
      %351 = vmatpush.bf16.msra.mxu0 %v340
      %352 = vmatpush.bf16.msra.mxu0 %v327
      %353 = vmatmul.bf16.gmra.mxu0 %v337
      %v354 = vpop.f32.mrf.mxu0
      %v355 = vadd.f32 0.0, %v354
      %v356 = vpop.f32.mrf.mxu0
      %357 = vdwg.mxu0
      %358 = vmatpush.bf16.msra.mxu0 0
      %359 = vmatpush.bf16.msra.mxu0 0
      %360 = vmatpush.bf16.msra.mxu0 0
      %361 = vmatpush.bf16.msra.mxu0 0
      %362 = vmatpush.bf16.msra.mxu0 0
      %363 = vmatpush.bf16.msra.mxu0 0
      %364 = vmatpush.bf16.msra.mxu0 %v343
      %365 = vmatpush.bf16.msra.mxu0 %v331
      %366 = vmatmul.bf16.gmra.mxu0 %v337
      %v367 = vpop.f32.mrf.mxu0
      %v368 = vadd.f32 0.0, %v367
      %v369 = vpop.f32.mrf.mxu0
      %370 = vdwg.mxu0
      %v372 = vsel %vm335, %v280, 0
      %v375 = vsel %vm271, %v269, 0
      %v378 = vsel %vm271, %v270, 0
      %380 = vmatpush.bf16.msra.mxu0 0
      %381 = vmatpush.bf16.msra.mxu0 0
      %382 = vmatpush.bf16.msra.mxu0 0
      %383 = vmatpush.bf16.msra.mxu0 0
      %384 = vmatpush.bf16.msra.mxu0 0
      %385 = vmatpush.bf16.msra.mxu0 0
      %386 = vmatpush.bf16.msra.mxu0 %v375
      %387 = vmatpush.bf16.msra.mxu0 %v274
      %388 = vmatmul.bf16.gmra.mxu0 %v372
      %v389 = vpop.f32.mrf.mxu0
      %v390 = vadd.f32 %v355, %v389
      %v391 = vpop.f32.mrf.mxu0
      %392 = vdwg.mxu0
      %393 = vmatpush.bf16.msra.mxu0 0
      %394 = vmatpush.bf16.msra.mxu0 0
      %395 = vmatpush.bf16.msra.mxu0 0
      %396 = vmatpush.bf16.msra.mxu0 0
      %397 = vmatpush.bf16.msra.mxu0 0
      %398 = vmatpush.bf16.msra.mxu0 0
      %399 = vmatpush.bf16.msra.mxu0 %v378
      %400 = vmatpush.bf16.msra.mxu0 %v278
      %401 = vmatmul.bf16.gmra.mxu0 %v372
      %v402 = vpop.f32.mrf.mxu0
      %v403 = vadd.f32 %v368, %v402
      %v404 = vpop.f32.mrf.mxu0
      %405 = vdwg.mxu0
      %vm406 = vmand %vm201, %vm203
      %vm407 = vmand %vm202, %vm204
      %408 = vrot.lane.b32.xlu0 %v208, 113
      %v409 = vpop.permute.xlu0 %408
      %410 = vrot.lane.b32.xlu0 %v209, 113
      %v411 = vpop.permute.xlu0 %410
      %vm412 = vcmp.lt.s32.totalorder %v173, 113
      %v413 = vsel %vm412, %v409, %v411
      %v414 = vsel %vm412, %v411, %v409
      %v415 = vsel %vm406, 1, 0
      %v416 = vsel %vm407, 1, 0
      %vm417 = vcmp.eq.s32.totalorder %v415, 1
      %vm418 = vcmp.eq.s32.totalorder %v416, 1
      %v419 = vsel %vm417, %v413, 0.0
      %v420 = vsel %vm418, %v414, 0.0
      %v421 = vpack.c.bf16 %v420, %v419
      %422 = vrot.lane.b32.xlu0 %v208, 112
      %v423 = vpop.permute.xlu0 %422
      %424 = vrot.lane.b32.xlu0 %v209, 112
      %v425 = vpop.permute.xlu0 %424
      %vm426 = vcmp.lt.s32.totalorder %v173, 112
      %v427 = vsel %vm426, %v423, %v425
      %v428 = vsel %vm426, %v425, %v423
      %v429 = vsel %vm201, 1, 0
      %v430 = vsel %vm202, 1, 0
      %vm431 = vcmp.eq.s32.totalorder %v429, 1
      %vm432 = vcmp.eq.s32.totalorder %v430, 1
      %v433 = vsel %vm431, %v427, 0.0
      %v434 = vsel %vm432, %v428, 0.0
      %v435 = vpack.c.bf16 %v434, %v433
      %vm436 = vmand %vm201, %vm205
      %vm437 = vmand %vm202, %vm206
      %438 = vrot.lane.b32.xlu0 %v208, 111
      %v439 = vpop.permute.xlu0 %438
      %440 = vrot.lane.b32.xlu0 %v209, 111
      %v441 = vpop.permute.xlu0 %440
      %vm442 = vcmp.lt.s32.totalorder %v173, 111
      %v443 = vsel %vm442, %v439, %v441
      %v444 = vsel %vm442, %v441, %v439
      %v445 = vsel %vm436, 1, 0
      %v446 = vsel %vm437, 1, 0
      %vm447 = vcmp.eq.s32.totalorder %v445, 1
      %vm448 = vcmp.eq.s32.totalorder %v446, 1
      %v449 = vsel %vm447, %v443, 0.0
      %v450 = vsel %vm448, %v444, 0.0
      %v451 = vpack.c.bf16 %v450, %v449
      %v453 = vunpack.c.l.b16 %v421
      %v454 = vunpack.c.h.b16 %v421
      %v455 = vpack.c.b16 %v453, %v453
      %v456 = vpack.c.b16 %v454, %v454
      %v458 = vunpack.c.l.b16 %v435
      %v459 = vunpack.c.h.b16 %v435
      %v460 = vpack.c.b16 %v458, %v458
      %v461 = vpack.c.b16 %v459, %v459
      %v463 = vunpack.c.l.b16 %v451
      %v464 = vunpack.c.h.b16 %v451
      %v465 = vpack.c.b16 %v463, %v463
      %v466 = vpack.c.b16 %v464, %v464
      %v469 = vsel %vm271, %v455, %v460
      %v473 = vsel %vm271, %v456, %v461
      %s475 = scalar_lea.vmem %s1, 8
      %v476 = vld [vmem:[%s475] sm:$0xf]
      %v478 = vsel %vm335, %v476, 0
      %v481 = vsel %vm271, %v465, 0
      %v484 = vsel %vm271, %v466, 0
      %486 = vmatpush.bf16.msra.mxu0 0
      %487 = vmatpush.bf16.msra.mxu0 0
      %488 = vmatpush.bf16.msra.mxu0 0
      %489 = vmatpush.bf16.msra.mxu0 0
      %490 = vmatpush.bf16.msra.mxu0 0
      %491 = vmatpush.bf16.msra.mxu0 0
      %492 = vmatpush.bf16.msra.mxu0 %v481
      %493 = vmatpush.bf16.msra.mxu0 %v469
      %494 = vmatmul.bf16.gmra.mxu0 %v478
      %v495 = vpop.f32.mrf.mxu0
      %v496 = vadd.f32 0.0, %v495
      %v497 = vpop.f32.mrf.mxu0
      %498 = vdwg.mxu0
      %499 = vmatpush.bf16.msra.mxu0 0
      %500 = vmatpush.bf16.msra.mxu0 0
      %501 = vmatpush.bf16.msra.mxu0 0
      %502 = vmatpush.bf16.msra.mxu0 0
      %503 = vmatpush.bf16.msra.mxu0 0
      %504 = vmatpush.bf16.msra.mxu0 0
      %505 = vmatpush.bf16.msra.mxu0 %v484
      %506 = vmatpush.bf16.msra.mxu0 %v473
      %507 = vmatmul.bf16.gmra.mxu0 %v478
      %v508 = vpop.f32.mrf.mxu0
      %v509 = vadd.f32 0.0, %v508
      %v510 = vpop.f32.mrf.mxu0
      %511 = vdwg.mxu0
      %v512 = vadd.f32 %v390, %v496
      %v513 = vadd.f32 %v403, %v509
      %515 = vset.pattern.permute.xlu0 0
      %516 = vperm.xlu0 %515, %v207
      %v517 = vpop.permute.xlu0 %516
      %v519 = vadd.f32 %v512, %v517
      %v520 = vadd.f32 %v513, %v517
      %521 = vst [vmem:[%s170] sm:$0xff] %v519
      %522 = vst [vmem:[%s170 + $0x8] sm:$0xff] %v520
      %p523 = scmp.lt.s32.totalorder %s14, 1
      %s524 = scalar_select %p523, %s14, 1
      %s525 = smul.addr %s524, 2
      %s526 = smul.addr %s525, 8
      %s527 = scalar_lea.vmem %s3, %s526
      // Predicated region
      $region33: #{combine_quant_block.1} parent=31 // pred_check
        %p528 = pneg %p100
      $region34: #{combine_quant_block.1} parent=31 // pred_check_branch
        %530 = sbr.rel (%p528) target = $region36
      $region35: #{combine_quant_block.1} parent=31 // pred_region
        _
      $region36: #{combine_quant_block.1} parent=31 // pred_fallthru
        _
    $region32: #{combine_quant_block.1} parent=5 // pred_fallthru
      _
    %p531 = scmp.le.s32.totalorder 2, %s9
    // Predicated region
    $region37: #{combine_quant_block.1} parent=5 // pred_check
      %p532 = pneg %p531
    $region38: #{combine_quant_block.1} parent=5 // pred_check_branch
      %534 = sbr.rel (%p532) target = $region40
    $region39: #{combine_quant_block.1} parent=5 // pred_region
      %s535 = ssub.s32 %s9, 2
      // Predicated region
      $region41: #{combine_quant_block.1} parent=39 // pred_check
        %p536 = pneg %p106
      $region42: #{combine_quant_block.1} parent=39 // pred_check_branch
        %538 = sbr.rel (%p536) target = $region44
      $region43: #{combine_quant_block.1} parent=39 // pred_region
        %p539 = scmp.lt.s32.totalorder %s15, 1
        %s540 = scalar_select %p539, %s15, 1
        %s541 = smul.addr %s540, 2
        %s542 = smul.addr %s541, 8
        %s543 = scalar_lea.vmem %s3, %s542
      $region44: #{combine_quant_block.1} parent=39 // pred_fallthru
        _
    $region40: #{combine_quant_block.1} parent=5 // pred_fallthru
      _
  $region6: #{combine_quant_block.1} parent=0 // loop_footer
    %s13 = sadd.s32 1, %s9
  $region7: #{combine_quant_block.1} parent=0 // loop_footer_branch
    %8 = sbr.rel target = $region3
  $region8: #{combine_quant_block.1} parent=0 // loop_exit
    _

</llo_original>
